<compile_context>
chip_gen: v6e
topology: v6e:2x2x1
jax: 0.10.0
libtpu: 0.0.40
codegen_flags: <defaults>
</compile_context>

<pallas_src>
import functools

import jax
import jax.numpy as jnp
from jax import lax
from jax.experimental import pallas as pl
from jax.experimental.pallas import tpu as pltpu


_TINY_ELEMENTS = 64 * 1024  # below this, pallas_call launch overhead dominates


# ----------------------------------------------------------------------------- hardware
def _device_kind() -> str:
    try:
        return jax.devices()[0].device_kind.lower()
    except Exception:
        return ""


def _num_tensorcores(kind: str) -> int:
    # 2 TensorCores per device: v4 / v5p (megacore) and v7x. Single-TC: v2/v3/v5e/v6e.
    if any(t in kind for t in ("v2", "v3", "v5e", "v5 lite", "v6")):
        return 1
    if any(t in kind for t in ("v4", "v5p", "v7", "7x")):
        return 2
    return 1


def _vmem_capacity_bytes() -> int:
    try:
        return int(pltpu.get_tpu_info().vmem_capacity_bytes)
    except Exception:
        return 64 * 1024 * 1024  # smallest current physical VMEM (v7x) — conservative


# ----------------------------------------------------------------------------- kernel
def _combined_loss_kernel(a_ref, b_ref, out_ref, *, n_rows, block_m,
                          tiles_per_split, use_mxu):
    s = pl.program_id(0)          # split (parallel axis -> one per TensorCore on 2-TC parts)
    t = pl.program_id(1)          # tile within split (arbitrary / reduction axis)

    # Zero the per-split accumulator block at the start of each split's reduction.
    @pl.when(t == 0)
    def _init():
        out_ref[...] = jnp.zeros_like(out_ref)

    # Stream at storage dtype, compute in f32 (required on v5e, cheap elsewhere).
    a = a_ref[...].astype(jnp.float32)
    b = b_ref[...].astype(jnp.float32)

    if use_mxu:
        # Per-row sums on the otherwise-idle MXU: (block_m, d) @ ones(d, 128) -> lane 0.
        d = a_ref.shape[1]
        ones = jnp.ones((d, 128), dtype=jnp.bfloat16)

        def _rowsum(x):
            return jnp.dot(x.astype(jnp.bfloat16), ones,
                           preferred_element_type=jnp.float32)[:, :1]

        dot = _rowsum(a * b)
        saa = _rowsum(a * a)
        sbb = _rowsum(b * b)
    else:
        # XLU cross-lane reductions; exact f32 path (default for f32 inputs / large d / v5e).
        dot = jnp.sum(a * b, axis=1, keepdims=True)
        saa = jnp.sum(a * a, axis=1, keepdims=True)
        sbb = jnp.sum(b * b, axis=1, keepdims=True)

    # PyTorch F.cosine_similarity clamps each norm with eps:
    #   dot / (max(|a|,eps) * max(|b|,eps)) == dot * rsqrt(max(saa,eps^2)*max(sbb,eps^2))
    eps2 = jnp.float32(1e-8) * jnp.float32(1e-8)
    denom_sq = jnp.maximum(saa, eps2) * jnp.maximum(sbb, eps2)
    cos_sim = dot * lax.rsqrt(denom_sq)

    # Mask rows that fall outside the real batch (ragged final tile and the clamped
    # duplicate tile of an uneven split both land here).
    logical_tile = s * tiles_per_split + t
    row = logical_tile * block_m + lax.broadcasted_iota(jnp.int32, (block_m, 1), 0)
    valid = row < n_rows
    partial = jnp.sum(jnp.where(valid, 1.0 - cos_sim, 0.0))

    # Accumulate the split's partial sum into the resident output block.
    out_ref[...] += partial


# ----------------------------------------------------------------------------- reference
def _reference(a, b, margin=0.1):
    """Pure-JAX equivalent of the PyTorch CombinedLoss.forward (oracle + fallback path)."""
    a = a.astype(jnp.float32)
    b = b.astype(jnp.float32)
    eps = jnp.float32(1e-8)
    dot = jnp.sum(a * b, axis=1)
    na = jnp.maximum(jnp.sqrt(jnp.sum(a * a, axis=1)), eps)
    nb = jnp.maximum(jnp.sqrt(jnp.sum(b * b, axis=1)), eps)
    cos_sim = dot / (na * nb)
    cos_loss = jnp.mean(1.0 - cos_sim)
    dist = jnp.sqrt(jnp.sum((a - b) ** 2, axis=1))
    margin_loss = jnp.mean(jnp.maximum(0.0, -(dist - dist) + jnp.float32(margin)))
    return cos_loss + margin_loss


# ----------------------------------------------------------------------------- wrapper
def combined_loss(a, b, margin=0.1, *, block_m=None, force_pallas=False, use_mxu="auto"):
    """Pallas TPU implementation of CombinedLoss.forward(a, b) -> scalar."""
    assert a.shape == b.shape and a.ndim == 2, "expected matching (batch, feature) inputs"
    n, d = a.shape

    # MarginRankingLoss(dist, dist, target=+1) == mean(max(0, 0 + margin)) == max(0, margin).
    margin_loss = max(0.0, float(margin))

    use_pallas = force_pallas or (block_m is not None) or (n * d >= _TINY_ELEMENTS)
    if not use_pallas:
        return _reference(a, b, margin)

    kind = _device_kind()
    itemsize = jnp.dtype(a.dtype).itemsize
    sublane = max(8, 32 // max(1, itemsize))        # 8 for f32, 16 for bf16, 32 for int8
    d_pad = max(128, ((d + 127) // 128) * 128)      # lane-padded feature dim
    vmem_cap = _vmem_capacity_bytes()

    # Generation-aware budget for the 2 inputs x 2 pipeline buffers (≈ 16-24 MiB).
    input_budget = min(24 << 20, max(8 << 20, int(vmem_cap * 0.4)))

    if block_m is None:
        block_m = max(sublane, input_budget // (4 * d_pad * itemsize))
    block_m = int(block_m)
    if block_m >= n:
        block_m = n                                  # full batch dim is always legal
    else:
        block_m = max(sublane, (block_m // sublane) * sublane)  # sublane-aligned tile

    num_tiles = pl.cdiv(n, block_m)
    # Leading "parallel" axis: 2 partial sums only when the chip actually has 2 TCs.
    num_splits = 2 if (_num_tensorcores(kind) >= 2 and num_tiles >= 2) else 1
    tiles_per_split = pl.cdiv(num_tiles, num_splits)

    # MXU offload of the per-row reductions: 16-bit inputs + small d on v6e/v7x.
    if use_mxu == "auto":
        use_mxu = (itemsize <= 2 and d_pad <= 512
                   and any(g in kind for g in ("v6", "v7", "7x")))
    use_mxu = bool(use_mxu)

    # Deeper pipelining only pays when blocks are forced small (tiny batch / explicit block_m).
    rows_pad = ((min(block_m, n) + sublane - 1) // sublane) * sublane
    per_block_bytes = rows_pad * d_pad * itemsize
    n_buffers = 3 if (per_block_bytes <= (2 << 20) and tiles_per_split >= 3) else 2

    needed_vmem = (2 * n_buffers * per_block_bytes            # input pipeline buffers
                   + num_splits * 8 * 128 * 4 * 2             # resident output blocks
                   + (d_pad * 128 * 2 if use_mxu else 0)      # ones(d,128) constant
                   + (1 << 20))                               # internal scratch slack
    vmem_ceiling = max(vmem_cap - (16 << 20), 32 << 20)
    vmem_limit = int(min(max(needed_vmem + (4 << 20), 32 << 20), vmem_ceiling))
    if needed_vmem > vmem_limit:
        # Even the minimum (sublane-row) block does not fit the VMEM ceiling (huge d).
        # TODO(synk): add a feature-dim reduction grid axis instead of falling back.
        return _reference(a, b, margin)

    kernel = functools.partial(
        _combined_loss_kernel,
        n_rows=n, block_m=block_m, tiles_per_split=tiles_per_split, use_mxu=use_mxu)

    def in_index(s, t):
        # Clamp so the padded final step of an uneven split never indexes an
        # out-of-bounds block; its rows are masked to zero inside the kernel.
        return (jnp.minimum(s * tiles_per_split + t, num_tiles - 1), 0)

    spec_kwargs = dict(pipeline_mode=pl.Buffered(3)) if n_buffers == 3 else {}
    in_spec = pl.BlockSpec((block_m, d), in_index, **spec_kwargs)

    cost = pl.CostEstimate(
        flops=8 * n * d,
        transcendentals=n,
        bytes_accessed=2 * n * d * itemsize + num_splits * 8 * 128 * 4)

    partials = pl.pallas_call(
        kernel,
        out_shape=jax.ShapeDtypeStruct((num_splits, 8, 128), jnp.float32),
        grid=(num_splits, tiles_per_split),
        in_specs=[in_spec, in_spec],
        # Lane-dense (8,128) accumulator block per split; every element holds the same
        # partial sum, the wrapper reads element [s, 0, 0].
        out_specs=pl.BlockSpec((1, 8, 128), lambda s, t: (s, 0, 0)),
        compiler_params=pltpu.CompilerParams(
            dimension_semantics=("parallel", "arbitrary"),
            vmem_limit_bytes=vmem_limit),
        cost_estimate=cost,
    )(a, b)

    cos_loss = jnp.sum(partials[:, 0, 0]) / jnp.float32(n)
    return cos_loss + jnp.float32(margin_loss)


# ----------------------------------------------------------------------------- tests
if __name__ == "__main__":
    key = jax.random.PRNGKey(0)
    k1, k2, k3, k4, k5, k6, k7, k8 = jax.random.split(key, 8)

    # 1) Original tiny shape (batch=8, feature=32) — force the Pallas path.
    a = jax.random.normal(k1, (8, 32), jnp.float32)
    b = jax.random.normal(k2, (8, 32), jnp.float32)
    out = jax.block_until_ready(combined_loss(a, b, margin=0.1, force_pallas=True))
    ref = _reference(a, b, 0.1)
    assert jnp.allclose(out, ref, atol=1e-5, rtol=1e-5), (out, ref)

    # 2) Multi-tile + ragged final tile (50 rows, block_m=16); small blocks exercise
    #    the pl.Buffered(3) input pipelining path on single-TC chips.
    a2 = jax.random.normal(k3, (50, 128), jnp.float32)
    b2 = jax.random.normal(k4, (50, 128), jnp.float32)
    out = jax.block_until_ready(combined_loss(a2, b2, margin=0.1, block_m=16))
    ref = _reference(a2, b2, 0.1)
    assert jnp.allclose(out, ref, atol=1e-5, rtol=1e-5), (out, ref)

    # 3) Odd tile count (clamped duplicate tile fully masked on 2-TC parts) + negative margin.
    a3 = jax.random.normal(k5, (40, 128), jnp.float32)
    b3 = jax.random.normal(k6, (40, 128), jnp.float32)
    out = jax.block_until_ready(combined_loss(a3, b3, margin=-0.05, block_m=16))
    ref = _reference(a3, b3, -0.05)
    assert jnp.allclose(out, ref, atol=1e-5, rtol=1e-5), (out, ref)

    # 4) bf16 inputs: streamed at storage dtype; on v6e/v7x the per-row sums run on the
    #    MXU with bf16 products (loose tolerance covers both the MXU and the XLU path).
    a4 = a3.astype(jnp.bfloat16)
    b4 = b3.astype(jnp.bfloat16)
    out = jax.block_until_ready(combined_loss(a4, b4, margin=0.1, block_m=16))
    ref = _reference(a4, b4, 0.1)
    assert jnp.allclose(out, ref, atol=2e-3, rtol=2e-3), (out, ref)

    # 5) Force the MXU row-sum path so it is compile-tested on any chip generation.
    out = jax.block_until_ready(combined_loss(a4, b4, margin=0.1, block_m=16, use_mxu=True))
    assert jnp.allclose(out, ref, atol=2e-3, rtol=2e-3), (out, ref)

    # 6) Larger batch with auto block sizing (uncapped block_m, multi-MiB tiles, ragged tail).
    a5 = jax.random.normal(k7, (8192, 512), jnp.float32)
    b5 = jax.random.normal(k8, (8192, 512), jnp.float32)
    out = jax.block_until_ready(combined_loss(a5, b5, margin=0.1))
    ref = _reference(a5, b5, 0.1)
    assert jnp.allclose(out, ref, atol=2e-5, rtol=2e-5), (out, ref)

    # 7) Tiny-input auto-dispatch goes through plain XLA (no kernel launch).
    out = jax.block_until_ready(combined_loss(a2, b2, margin=0.1))
    ref = _reference(a2, b2, 0.1)
    assert jnp.allclose(out, ref, atol=1e-5, rtol=1e-5), (out, ref)

    # TODO(synk): the PyTorch forward print()s the two partial losses; that debug
    # side-effect is intentionally omitted.
    print("KERNEL_OK")
</pallas_src>

<mosaic_0001>
module attributes {stable_mosaic.version = 11 : i64} {
  func.func @_combined_loss_kernel(%arg0: i32, %arg1: i32, %arg2: memref<8x32xf32, #tpu.memory_space<vmem>>, %arg3: memref<8x32xf32, #tpu.memory_space<vmem>>, %arg4: memref<1x8x128xf32, #tpu.memory_space<vmem>>) attributes {dimension_semantics = [#tpu.dimension_semantics<parallel>, #tpu.dimension_semantics<arbitrary>], iteration_bounds = array<i64: 1, 1>, scalar_prefetch = 0 : i64, scratch_operands = 0 : i64, tpu.core_type = #tpu.core_type<tc>, window_params = [{transform_indices = @transform_0, window_bounds = array<i64: 8, 32>}, {transform_indices = @transform_1, window_bounds = array<i64: 8, 32>}, {transform_indices = @transform_2, window_bounds = array<i64: 1, 8, 128>}]} {
    %c0_i32 = arith.constant 0 : i32
    %0 = arith.cmpi eq, %arg1, %c0_i32 : i32
    %1 = arith.extui %0 : i1 to i32
    %c0_i32_0 = arith.constant 0 : i32
    %2 = arith.cmpi ne, %1, %c0_i32_0 : i32
    scf.if %2 {
      %cst_18 = arith.constant 0.000000e+00 : f32
      %42 = vector.broadcast %cst_18 : f32 to vector<1x8x128xf32>
      %c0_19 = arith.constant 0 : index
      %c0_20 = arith.constant 0 : index
      %c0_21 = arith.constant 0 : index
      %43 = vector.load %arg4[%c0_19, %c0_20, %c0_21] : memref<1x8x128xf32, #tpu.memory_space<vmem>>, vector<1x8x128xf32>
      tpu.vector_store %arg4[%c0_19, %c0_20, %c0_21], %42 {strides = array<i32>} : memref<1x8x128xf32, #tpu.memory_space<vmem>>, vector<1x8x128xf32>,
    } else {
    }
    %c0 = arith.constant 0 : index
    %c0_1 = arith.constant 0 : index
    %3 = vector.load %arg2[%c0, %c0_1] : memref<8x32xf32, #tpu.memory_space<vmem>>, vector<8x32xf32>
    %c0_2 = arith.constant 0 : index
    %c0_3 = arith.constant 0 : index
    %4 = vector.load %arg3[%c0_2, %c0_3] : memref<8x32xf32, #tpu.memory_space<vmem>>, vector<8x32xf32>
    %5 = arith.mulf %3, %4 : vector<8x32xf32>
    %cst = arith.constant dense<0.000000e+00> : vector<8xf32>
    %6 = vector.multi_reduction <add>, %5, %cst [1] : vector<8x32xf32> to vector<8xf32>
    %7 = vector.shape_cast %6 : vector<8xf32> to vector<8x1xf32>
    %8 = arith.mulf %3, %3 : vector<8x32xf32>
    %cst_4 = arith.constant dense<0.000000e+00> : vector<8xf32>
    %9 = vector.multi_reduction <add>, %8, %cst_4 [1] : vector<8x32xf32> to vector<8xf32>
    %10 = vector.shape_cast %9 : vector<8xf32> to vector<8x1xf32>
    %11 = arith.mulf %4, %4 : vector<8x32xf32>
    %cst_5 = arith.constant dense<0.000000e+00> : vector<8xf32>
    %12 = vector.multi_reduction <add>, %11, %cst_5 [1] : vector<8x32xf32> to vector<8xf32>
    %13 = vector.shape_cast %12 : vector<8xf32> to vector<8x1xf32>
    %cst_6 = arith.constant 9.99999993E-9 : f32
    %cst_7 = arith.constant 9.99999993E-9 : f32
    %14 = arith.mulf %cst_6, %cst_7 : f32
    %15 = vector.broadcast %14 : f32 to vector<8x1xf32>
    %16 = arith.maximumf %10, %15 : vector<8x1xf32>
    %17 = vector.broadcast %14 : f32 to vector<8x1xf32>
    %18 = arith.maximumf %13, %17 : vector<8x1xf32>
    %19 = arith.mulf %16, %18 : vector<8x1xf32>
    %20 = math.rsqrt %19 : vector<8x1xf32>
    %21 = arith.mulf %7, %20 : vector<8x1xf32>
    %c1_i32 = arith.constant 1 : i32
    %22 = arith.muli %arg0, %c1_i32 : i32
    %23 = arith.addi %22, %arg1 : i32
    %c8_i32 = arith.constant 8 : i32
    %24 = arith.muli %23, %c8_i32 : i32
    %25 = tpu.iota {dimensions = array<i32: 0>} : vector<8x1xi32>
    %26 = vector.broadcast %24 : i32 to vector<8x1xi32>
    %27 = arith.addi %26, %25 : vector<8x1xi32>
    %c8_i32_8 = arith.constant 8 : i32
    %28 = vector.broadcast %c8_i32_8 : i32 to vector<8x1xi32>
    %29 = arith.cmpi slt, %27, %28 : vector<8x1xi32>
    %cst_9 = arith.constant 1.000000e+00 : f32
    %30 = vector.broadcast %cst_9 : f32 to vector<8x1xf32>
    %31 = arith.subf %30, %21 : vector<8x1xf32>
    %cst_10 = arith.constant 0.000000e+00 : f32
    %32 = vector.broadcast %cst_10 : f32 to vector<8x1xf32>
    %33 = arith.select %29, %31, %32 : vector<8x1xi1>, vector<8x1xf32>
    %34 = vector.shape_cast %33 : vector<8x1xf32> to vector<1x8x1xf32>
    %cst_11 = arith.constant dense<0.000000e+00> : vector<1xf32>
    %35 = vector.multi_reduction <add>, %34, %cst_11 [1, 2] : vector<1x8x1xf32> to vector<1xf32>
    %36 = vector.shape_cast %35 : vector<1xf32> to vector<1x1x1xf32>
    %37 = vector.extract %36[0, 0, 0] : f32 from vector<1x1x1xf32>
    %c0_12 = arith.constant 0 : index
    %c0_13 = arith.constant 0 : index
    %c0_14 = arith.constant 0 : index
    %38 = vector.load %arg4[%c0_12, %c0_13, %c0_14] : memref<1x8x128xf32, #tpu.memory_space<vmem>>, vector<1x8x128xf32>
    %39 = vector.broadcast %37 : f32 to vector<1x8x128xf32>
    %40 = arith.addf %38, %39 : vector<1x8x128xf32>
    %c0_15 = arith.constant 0 : index
    %c0_16 = arith.constant 0 : index
    %c0_17 = arith.constant 0 : index
    %41 = vector.load %arg4[%c0_15, %c0_16, %c0_17] : memref<1x8x128xf32, #tpu.memory_space<vmem>>, vector<1x8x128xf32>
    tpu.vector_store %arg4[%c0_15, %c0_16, %c0_17], %40 {strides = array<i32>} : memref<1x8x128xf32, #tpu.memory_space<vmem>>, vector<1x8x128xf32>,
    return
  }
  func.func @transform_0(%arg0: i32, %arg1: i32) -> (i32, i32) {
    %c1_i32 = arith.constant 1 : i32
    %0 = arith.muli %arg0, %c1_i32 : i32
    %1 = arith.addi %0, %arg1 : i32
    %c0_i32 = arith.constant 0 : i32
    %2 = arith.minsi %1, %c0_i32 : i32
    %c0_i32_0 = arith.constant 0 : i32
    %c0_i32_1 = arith.constant 0 : i32
    return %2, %c0_i32_0 : i32, i32
  }
  func.func @transform_1(%arg0: i32, %arg1: i32) -> (i32, i32) {
    %c1_i32 = arith.constant 1 : i32
    %0 = arith.muli %arg0, %c1_i32 : i32
    %1 = arith.addi %0, %arg1 : i32
    %c0_i32 = arith.constant 0 : i32
    %2 = arith.minsi %1, %c0_i32 : i32
    %c0_i32_0 = arith.constant 0 : i32
    %c0_i32_1 = arith.constant 0 : i32
    return %2, %c0_i32_0 : i32, i32
  }
  func.func @transform_2(%arg0: i32, %arg1: i32) -> (i32, i32, i32) {
    %c0_i32 = arith.constant 0 : i32
    %c0_i32_0 = arith.constant 0 : i32
    %c0_i32_1 = arith.constant 0 : i32
    return %arg0, %c0_i32, %c0_i32_0 : i32, i32, i32
  }
}

</mosaic_0001>

<llo_original>
// kernel: tpu_custom_call.1
$region0: #{tpu_custom_call.1}
  #allocation0 [shape = 'u32[]', space=smem, size = 0x4, offset = 0x4, fixed_abs, tag = 'smem constant byte address 0x4 - core index']
  #allocation1 [shape = 'u32[144,128]{1,0:T(1,128)}', space=vmem, size = 0x12000, scoped, tag = 'internal scratch']
  %s0 = inlined_call_operand.hbm [shape: f32[8,32], index: 0, kind: input, shape index: {}]
  %s1 = inlined_call_operand.hbm [shape: f32[8,32], index: 1, kind: input, shape index: {}]
  %s2 = inlined_call_operand.hbm [shape: f32[1,8,128], index: 2, kind: output, shape index: {}]
  %s3 = sld [smem:[#allocation0]]
  $region30: #{tpu_custom_call.1} parent=0
    _
  %s5 = ssub.s32 1, %s3
  %s6 = scalar_select 0, %s5, %s3
  $region1: #{tpu_custom_call.1} parent=0
    #allocation2 [shape = 'u8[4096]{0}', space=vmem, size = 0x1000, scoped, tag = 'input window, operand 0, single buffered']
    #allocation3 [shape = 's32[1]{0}', space=sflag, size = 0x4, scoped, tag = 'scoped memory for tpu_custom_call.1']
    #allocation4 [shape = 's32[1]{0}', space=sflag, size = 0x4, scoped, tag = 'scoped memory for tpu_custom_call.1']
    #allocation5 [shape = 'u8[4096]{0}', space=vmem, size = 0x1000, scoped, tag = 'input window, operand 1, single buffered']
    #allocation6 [shape = 's32[1]{0}', space=sflag, size = 0x4, scoped, tag = 'scoped memory for tpu_custom_call.1']
    #allocation7 [shape = 'u8[4096]{0}', space=vmem, size = 0x1000, scoped, tag = 'output window, operand 0, single buffered']
    %7 = vsyncpa [#allocation3], 0
    %8 = vsyncpa [#allocation6], 0
    %9 = vsyncpa [#allocation4], 0
    // Predicated region
    $region2: #{tpu_custom_call.1} parent=1 // pred_check
      _
    $region3: #{tpu_custom_call.1} parent=1 // pred_check_branch
      %11 = sbr.rel (0) target = $region5
    $region4: #{tpu_custom_call.1} parent=1 // pred_region
      %s12 = sadd.s32 0, 0
      %p13 = scmp.lt.s32.totalorder %s12, 0
      %s14 = scalar_select %p13, %s12, 0
      %s16 = ssub.s32 128, 128
      %17 = vsyncadd [#allocation3], %s16
      %s18 = smul.addr %s14, 128
      %s19 = scalar_lea.hbm %s0, %s18
      %s21 = sshll.u32 [#allocation2], 4
      %s22 = int_to_ptr.vmem [resolvable:$true] %s21
      %24 = dma.hbm_to_vmem [thread:$0]  %s19, 128, %s22, [#allocation3]
    $region5: #{tpu_custom_call.1} parent=1 // pred_fallthru
      _
    // Predicated region
    $region6: #{tpu_custom_call.1} parent=1 // pred_check
      _
    $region7: #{tpu_custom_call.1} parent=1 // pred_check_branch
      %26 = sbr.rel (0) target = $region9
    $region8: #{tpu_custom_call.1} parent=1 // pred_region
      %s27 = sadd.s32 0, 0
      %p28 = scmp.lt.s32.totalorder %s27, 0
      %s29 = scalar_select %p28, %s27, 0
      %s31 = ssub.s32 128, 128
      %32 = vsyncadd [#allocation6], %s31
      %s33 = smul.addr %s29, 128
      %s34 = scalar_lea.hbm %s1, %s33
      %s36 = sshll.u32 [#allocation5], 4
      %s37 = int_to_ptr.vmem [resolvable:$true] %s36
      %39 = dma.hbm_to_vmem [thread:$0]  %s34, 128, %s37, [#allocation6]
    $region9: #{tpu_custom_call.1} parent=1 // pred_fallthru
      _
    // Predicated region
    $region10: #{tpu_custom_call.1} parent=1 // pred_check
      _
    $region11: #{tpu_custom_call.1} parent=1 // pred_check_branch
      %41 = sbr.rel (0) target = $region13
    $region12: #{tpu_custom_call.1} parent=1 // pred_region
      %42 = dma.done [#allocation3], 128
    $region13: #{tpu_custom_call.1} parent=1 // pred_fallthru
      _
    // Predicated region
    $region14: #{tpu_custom_call.1} parent=1 // pred_check
      _
    $region15: #{tpu_custom_call.1} parent=1 // pred_check_branch
      %44 = sbr.rel (0) target = $region17
    $region16: #{tpu_custom_call.1} parent=1 // pred_region
      %45 = dma.done [#allocation6], 128
    $region17: #{tpu_custom_call.1} parent=1 // pred_fallthru
      _
    %s46 = sadd.s32 0, 0
    %p47 = scmp.lt.s32.totalorder %s46, 0
    %s48 = scalar_select %p47, %s46, 0
    %s49 = sadd.s32 0, 0
    %p50 = scmp.lt.s32.totalorder %s49, 0
    %s51 = scalar_select %p50, %s49, 0
    %p52 = scmp.eq.s32.totalorder 0, 0
    // Predicated region
    $region18: #{tpu_custom_call.1} parent=1 // pred_check
      %p53 = pneg %p52
    $region19: #{tpu_custom_call.1} parent=1 // pred_check_branch
      %55 = sbr.rel (%p53) target = $region21
    $region20: #{tpu_custom_call.1} parent=1 // pred_region
      %56 = vst [vmem:[#allocation7] sm:$0xff] 0.0
    $region21: #{tpu_custom_call.1} parent=1 // pred_fallthru
      _
    %v57 = vld [vmem:[#allocation2] sm:$0xff]
    %v58 = vld [vmem:[#allocation5] sm:$0xff]
    %v59 = vmul.f32 %v57, %v58
    %vm60 = vcmask 261120
    %v61 = vsel %vm60, %v59, 0.0
    %62 = vadd.xlane.f32.xlu0 %v61
    %v63 = vpop.xlane.xlu0 %62
    %v64 = vmul.f32 %v57, %v57
    %v65 = vsel %vm60, %v64, 0.0
    %66 = vadd.xlane.f32.xlu0 %v65
    %v67 = vpop.xlane.xlu0 %66
    %v68 = vmul.f32 %v58, %v58
    %v69 = vsel %vm60, %v68, 0.0
    %70 = vadd.xlane.f32.xlu0 %v69
    %v71 = vpop.xlane.xlu0 %70
    %v72 = vmax.f32 %v67, 1e-16
    %v73 = vmax.f32 %v71, 1e-16
    %v74 = vmul.f32 %v72, %v73
    %v75 = vrsqrt.pop %v74
    %v76 = vmul.f32 %v63, %v75
    %s77 = sadd.s32 0, 0
    %s78 = smul.u32 %s77, 8
    %v79 = vlaneseq
    %v80 = vshrl.u32 %v79, 7
    %v81 = vstv %s78
    %v82 = vadd.s32 %v81, %v80
    %vm83 = vcmp.lt.s32.totalorder %v82, 8
    %v84 = vsub.f32 1.0, %v76
    %v85 = vsel %vm83, %v84, 0.0
    %vm86 = vcmask 7168
    %v87 = vsel %vm86, %v85, 0.0
    %88 = vadd.xlane.f32.xlu0 %v87
    %v89 = vpop.xlane.xlu0 %88
    %v90 = vrot.slane %v89, 4
    %v91 = vadd.f32 %v89, %v90
    %v92 = vrot.slane %v91, 2
    %v93 = vadd.f32 %v91, %v92
    %v94 = vrot.slane %v93, 1
    %v95 = vadd.f32 %v93, %v94
    %s96 = vtos %v95
    %v97 = vld [vmem:[#allocation7] sm:$0xff]
    %v98 = vstv %s96
    %v99 = vadd.f32 %v97, %v98
    %100 = vst [vmem:[#allocation7] sm:$0xff] %v99
    // Predicated region
    $region22: #{tpu_custom_call.1} parent=1 // pred_check
      _
    $region23: #{tpu_custom_call.1} parent=1 // pred_check_branch
      %102 = sbr.rel (0) target = $region25
    $region24: #{tpu_custom_call.1} parent=1 // pred_region
      %s104 = ssub.s32 128, 128
      %105 = vsyncadd [#allocation4], %s104
      %s107 = sshll.u32 [#allocation7], 4
      %s108 = int_to_ptr.vmem [resolvable:$true] %s107
      %110 = dma.vmem_to_hbm [thread:$0]  %s108, 128, %s2, [#allocation4]
    $region25: #{tpu_custom_call.1} parent=1 // pred_fallthru
      _
    // Predicated region
    $region26: #{tpu_custom_call.1} parent=1 // pred_check
      _
    $region27: #{tpu_custom_call.1} parent=1 // pred_check_branch
      %112 = sbr.rel (0) target = $region29
    $region28: #{tpu_custom_call.1} parent=1 // pred_region
      %113 = dma.done [#allocation4], 128
    $region29: #{tpu_custom_call.1} parent=1 // pred_fallthru
      _
    %114 = vsyncpa [#allocation3], 1
    %115 = vsyncpa [#allocation6], 1
    %116 = vsyncpa [#allocation4], 1

</llo_original>
